<compile_context>
chip_gen: v5e
topology: v5e:2x2
jax: 0.10.0
libtpu: 0.0.40
codegen_flags: <defaults>
</compile_context>

<pallas_src>
import functools

import jax
import jax.numpy as jnp
from jax.experimental import pallas as pl
from jax.experimental.pallas import tpu as pltpu

_LANE = 128
_HIDDEN = 128  # fixed by the module definition


def _round_up(x, m):
    return ((x + m - 1) // m) * m


def dqn_kernel(x_ref, w1_ref, b1_ref, w2_ref, b2_ref, o_ref):
    # Two MXU matmuls + VPU bias/ReLU on resident VMEM tiles; f32 accumulation.
    h = jnp.dot(x_ref[...], w1_ref[...], preferred_element_type=jnp.float32)
    h = jnp.maximum(h + b1_ref[...], 0.0)                       # (Bt, 128) f32
    y = jnp.dot(h.astype(w2_ref.dtype), w2_ref[...],
                preferred_element_type=jnp.float32)              # (Bt, 128) f32
    o_ref[...] = (y + b2_ref[...]).astype(o_ref.dtype)


def prepare_dqn_params(w1_t, b1, w2_t, b2, *, compute_dtype=jnp.float32):
    """One-time weight prep (call at init / target-network update, NOT per step).

    Returns (params, d_out) where params = (w1_c, b1_2d, w2_p, b2_p):
      w1_c : (D_in, 128)   in compute_dtype
      b1_2d: (1, 128)      f32
      w2_p : (128, D_out_p) in compute_dtype, zero-padded to a 128-lane slab
      b2_p : (1, D_out_p)  f32, zero-padded
    """
    hidden = w1_t.shape[1]
    d_out = w2_t.shape[1]
    d_out_p = max(_LANE, _round_up(d_out, _LANE))

    w1_c = w1_t.astype(compute_dtype)
    b1_2d = b1.reshape(1, hidden).astype(jnp.float32)
    w2_p = jnp.zeros((hidden, d_out_p), compute_dtype).at[:, :d_out].set(
        w2_t.astype(compute_dtype))
    b2_p = jnp.zeros((1, d_out_p), jnp.float32).at[:, :d_out].set(
        b2.astype(jnp.float32))
    return (w1_c, b1_2d, w2_p, b2_p), d_out


@functools.partial(jax.jit,
                   static_argnames=("d_out", "block_batch", "out_dtype"))
def dqn_forward(x, params, *, d_out, block_batch=1024, out_dtype=jnp.float32):
    """Forward pass: relu(x @ w1 + b1) @ w2 + b2 using pre-prepared params."""
    w1_c, b1_2d, w2_p, b2_p = params
    B, d_in = x.shape
    hidden = w1_c.shape[1]
    d_out_p = w2_p.shape[1]
    compute_dtype = w1_c.dtype

    # ---- Batch tiling: large tile -> 1-2 grid steps for typical batches. ----
    # bf16 vregs pack 16 sublanes; f32 pack 8.
    sub = 16 if compute_dtype == jnp.bfloat16 else 8
    bt = min(block_batch, _round_up(B, sub))
    b_pad = _round_up(B, bt)
    n_steps = b_pad // bt

    xc = x if x.dtype == compute_dtype else x.astype(compute_dtype)
    if b_pad != B:  # padding skipped entirely when B is already tile-aligned
        xc = jnp.pad(xc, ((0, b_pad - B), (0, 0)))

    vmem = pltpu.MemorySpace.VMEM
    in_item = jnp.dtype(compute_dtype).itemsize
    out_item = jnp.dtype(out_dtype).itemsize
    cost = pl.CostEstimate(
        flops=2 * b_pad * (d_in * hidden + hidden * d_out_p),
        transcendentals=0,
        bytes_accessed=(b_pad * d_in * in_item            # x
                        + d_in * hidden * in_item          # w1
                        + hidden * d_out_p * in_item       # w2
                        + (hidden + d_out_p) * 4           # biases (f32)
                        + b_pad * d_out_p * out_item),     # out slab
    )

    out_pad = pl.pallas_call(
        dqn_kernel,
        out_shape=jax.ShapeDtypeStruct((b_pad, d_out_p), out_dtype),
        grid=(n_steps,),
        in_specs=[
            # Batch-blocked activations (only streamed input).
            pl.BlockSpec((bt, d_in), lambda i: (i, 0), memory_space=vmem),
            # Weights / biases: constant block index -> VMEM-resident across steps.
            pl.BlockSpec((d_in, hidden), lambda i: (0, 0), memory_space=vmem),
            pl.BlockSpec((1, hidden), lambda i: (0, 0), memory_space=vmem),
            pl.BlockSpec((hidden, d_out_p), lambda i: (0, 0), memory_space=vmem),
            pl.BlockSpec((1, d_out_p), lambda i: (0, 0), memory_space=vmem),
        ],
        out_specs=pl.BlockSpec((bt, d_out_p), lambda i: (i, 0),
                               memory_space=vmem),
        compiler_params=pltpu.CompilerParams(
            dimension_semantics=("parallel",)),
        cost_estimate=cost,
    )(xc, w1_c, b1_2d, w2_p, b2_p)

    # Strip batch + output-lane padding outside the kernel.
    return out_pad[:B, :d_out]


def init_params(key, input_dim, hidden_dim, output_dim):
    """Deterministic init mimicking PyTorch nn.Linear defaults (uniform +-1/sqrt(fan_in))."""
    k1, k2, k3, k4 = jax.random.split(key, 4)
    lim1 = 1.0 / jnp.sqrt(jnp.float32(input_dim))
    lim2 = 1.0 / jnp.sqrt(jnp.float32(hidden_dim))
    # Stored directly in the transposed (in, out) layout consumed by the kernel.
    w1_t = jax.random.uniform(k1, (input_dim, hidden_dim), jnp.float32, -lim1, lim1)
    b1 = jax.random.uniform(k2, (hidden_dim,), jnp.float32, -lim1, lim1)
    w2_t = jax.random.uniform(k3, (hidden_dim, output_dim), jnp.float32, -lim2, lim2)
    b2 = jax.random.uniform(k4, (output_dim,), jnp.float32, -lim2, lim2)
    return w1_t, b1, w2_t, b2


if __name__ == "__main__":
    input_dim = 16    # small observation vector
    hidden_dim = _HIDDEN
    output_dim = 4    # small discrete action space

    key = jax.random.PRNGKey(0)
    kx, kp, kx2 = jax.random.split(key, 3)
    w1_t, b1, w2_t, b2 = init_params(kp, input_dim, hidden_dim, output_dim)

    def ref_fwd(x):
        return jnp.maximum(x @ w1_t + b1, 0.0) @ w2_t + b2

    # Weight prep hoisted out of the forward path (done once).
    params_f32, d_out = prepare_dqn_params(w1_t, b1, w2_t, b2,
                                           compute_dtype=jnp.float32)
    params_bf16, _ = prepare_dqn_params(w1_t, b1, w2_t, b2,
                                        compute_dtype=jnp.bfloat16)

    # --- Small batch, f32 (tight tolerance) ---
    batch = 8
    x = jax.random.normal(kx, (batch, input_dim), jnp.float32)
    out = jax.block_until_ready(dqn_forward(x, params_f32, d_out=d_out))
    assert out.shape == (batch, output_dim)
    assert jnp.allclose(out, ref_fwd(x), atol=1e-5, rtol=1e-5)

    # --- Replay-sized, tile-unaligned batch exercising batch padding, f32 ---
    batch2 = 260  # not a multiple of the sublane tile -> exercises padding
    x2 = jax.random.normal(kx2, (batch2, input_dim), jnp.float32)
    out2 = jax.block_until_ready(dqn_forward(x2, params_f32, d_out=d_out))
    assert out2.shape == (batch2, output_dim)
    assert jnp.allclose(out2, ref_fwd(x2), atol=1e-4, rtol=1e-4)

    # --- bf16 compute path (valid on v5e/v6e/v7x), f32 accumulation/output ---
    out_bf = jax.block_until_ready(
        dqn_forward(x2, params_bf16, d_out=d_out))
    assert out_bf.shape == (batch2, output_dim)
    assert jnp.allclose(out_bf, ref_fwd(x2), atol=1e-1, rtol=1e-1)

    # --- bf16 writeback (halves the dominant HBM stream); looser tolerance ---
    out_bfo = jax.block_until_ready(
        dqn_forward(x2, params_bf16, d_out=d_out, out_dtype=jnp.bfloat16))
    assert out_bfo.shape == (batch2, output_dim)
    assert jnp.allclose(out_bfo.astype(jnp.float32), ref_fwd(x2),
                        atol=2e-1, rtol=2e-1)

    print("KERNEL_OK")
</pallas_src>

<mosaic_0001>
module attributes {stable_mosaic.version = 11 : i64} {
  func.func @dqn_kernel(%arg0: i32, %arg1: memref<8x16xf32, #tpu.memory_space<vmem>>, %arg2: memref<16x128xf32, #tpu.memory_space<vmem>>, %arg3: memref<1x128xf32, #tpu.memory_space<vmem>>, %arg4: memref<128x128xf32, #tpu.memory_space<vmem>>, %arg5: memref<1x128xf32, #tpu.memory_space<vmem>>, %arg6: memref<8x128xf32, #tpu.memory_space<vmem>>) attributes {dimension_semantics = [#tpu.dimension_semantics<parallel>], iteration_bounds = array<i64: 1>, scalar_prefetch = 0 : i64, scratch_operands = 0 : i64, tpu.core_type = #tpu.core_type<tc>, window_params = [{transform_indices = @transform_0, window_bounds = array<i64: 8, 16>}, {pipeline_mode = #tpu.pipeline_mode<synchronous>, transform_indices = @transform_1, window_bounds = array<i64: 16, 128>}, {pipeline_mode = #tpu.pipeline_mode<synchronous>, transform_indices = @transform_2, window_bounds = array<i64: 1, 128>}, {pipeline_mode = #tpu.pipeline_mode<synchronous>, transform_indices = @transform_3, window_bounds = array<i64: 128, 128>}, {pipeline_mode = #tpu.pipeline_mode<synchronous>, transform_indices = @transform_4, window_bounds = array<i64: 1, 128>}, {transform_indices = @transform_5, window_bounds = array<i64: 8, 128>}]} {
    %c0 = arith.constant 0 : index
    %c0_0 = arith.constant 0 : index
    %0 = vector.load %arg1[%c0, %c0_0] : memref<8x16xf32, #tpu.memory_space<vmem>>, vector<8x16xf32>
    %c0_1 = arith.constant 0 : index
    %c0_2 = arith.constant 0 : index
    %1 = vector.load %arg2[%c0_1, %c0_2] : memref<16x128xf32, #tpu.memory_space<vmem>>, vector<16x128xf32>
    %cst = arith.constant dense<0.000000e+00> : vector<8x128xf32>
    %2 = tpu.matmul %0, %1, %cst {dimension_numbers = #tpu.dot_dimension_numbers<[1], [0], [0], [1], [0, 0, 1, 1], [], []>} : vector<8x16xf32>, vector<16x128xf32>, vector<8x128xf32> -> vector<8x128xf32>
    %c0_3 = arith.constant 0 : index
    %c0_4 = arith.constant 0 : index
    %3 = vector.load %arg3[%c0_3, %c0_4] : memref<1x128xf32, #tpu.memory_space<vmem>>, vector<1x128xf32>
    %4 = vector.broadcast %3 : vector<1x128xf32> to vector<8x128xf32>
    %5 = arith.addf %2, %4 : vector<8x128xf32>
    %cst_5 = arith.constant 0.000000e+00 : f32
    %6 = vector.broadcast %cst_5 : f32 to vector<8x128xf32>
    %7 = arith.maximumf %5, %6 : vector<8x128xf32>
    %c0_6 = arith.constant 0 : index
    %c0_7 = arith.constant 0 : index
    %8 = vector.load %arg4[%c0_6, %c0_7] : memref<128x128xf32, #tpu.memory_space<vmem>>, vector<128x128xf32>
    %cst_8 = arith.constant dense<0.000000e+00> : vector<8x128xf32>
    %9 = tpu.matmul %7, %8, %cst_8 {dimension_numbers = #tpu.dot_dimension_numbers<[1], [0], [0], [1], [0, 0, 1, 1], [], []>} : vector<8x128xf32>, vector<128x128xf32>, vector<8x128xf32> -> vector<8x128xf32>
    %c0_9 = arith.constant 0 : index
    %c0_10 = arith.constant 0 : index
    %10 = vector.load %arg5[%c0_9, %c0_10] : memref<1x128xf32, #tpu.memory_space<vmem>>, vector<1x128xf32>
    %11 = vector.broadcast %10 : vector<1x128xf32> to vector<8x128xf32>
    %12 = arith.addf %9, %11 : vector<8x128xf32>
    %c0_11 = arith.constant 0 : index
    %c0_12 = arith.constant 0 : index
    %13 = vector.load %arg6[%c0_11, %c0_12] : memref<8x128xf32, #tpu.memory_space<vmem>>, vector<8x128xf32>
    tpu.vector_store %arg6[%c0_11, %c0_12], %12 {strides = array<i32>} : memref<8x128xf32, #tpu.memory_space<vmem>>, vector<8x128xf32>,
    return
  }
  func.func @transform_0(%arg0: i32) -> (i32, i32) {
    %c0_i32 = arith.constant 0 : i32
    %c0_i32_0 = arith.constant 0 : i32
    return %arg0, %c0_i32 : i32, i32
  }
  func.func @transform_1(%arg0: i32) -> (i32, i32) {
    %c0_i32 = arith.constant 0 : i32
    %c0_i32_0 = arith.constant 0 : i32
    %c0_i32_1 = arith.constant 0 : i32
    return %c0_i32, %c0_i32_0 : i32, i32
  }
  func.func @transform_2(%arg0: i32) -> (i32, i32) {
    %c0_i32 = arith.constant 0 : i32
    %c0_i32_0 = arith.constant 0 : i32
    %c0_i32_1 = arith.constant 0 : i32
    return %c0_i32, %c0_i32_0 : i32, i32
  }
  func.func @transform_3(%arg0: i32) -> (i32, i32) {
    %c0_i32 = arith.constant 0 : i32
    %c0_i32_0 = arith.constant 0 : i32
    %c0_i32_1 = arith.constant 0 : i32
    return %c0_i32, %c0_i32_0 : i32, i32
  }
  func.func @transform_4(%arg0: i32) -> (i32, i32) {
    %c0_i32 = arith.constant 0 : i32
    %c0_i32_0 = arith.constant 0 : i32
    %c0_i32_1 = arith.constant 0 : i32
    return %c0_i32, %c0_i32_0 : i32, i32
  }
  func.func @transform_5(%arg0: i32) -> (i32, i32) {
    %c0_i32 = arith.constant 0 : i32
    %c0_i32_0 = arith.constant 0 : i32
    return %arg0, %c0_i32 : i32, i32
  }
}

</mosaic_0001>

<llo_original>
// kernel: dqn_forward.1
$region0: #{dqn_forward.1}
  #allocation0 [shape = 'u32[]', space=smem, size = 0x4, offset = 0x4, fixed_abs, tag = 'smem constant byte address 0x4 - core index']
  #allocation1 [shape = 'u32[72,128]{1,0:T(1,128)}', space=vmem, size = 0x9000, scoped, tag = 'internal scratch']
  %s0 = inlined_call_operand.hbm [shape: f32[8,16], index: 0, kind: input, shape index: {}]
  %s1 = inlined_call_operand.hbm [shape: f32[16,128], index: 1, kind: input, shape index: {}]
  %s2 = inlined_call_operand.vmem [shape: f32[1,128], index: 2, kind: input, shape index: {}]
  %s3 = inlined_call_operand.hbm [shape: f32[128,128], index: 3, kind: input, shape index: {}]
  %s4 = inlined_call_operand.vmem [shape: f32[1,128], index: 4, kind: input, shape index: {}]
  %s5 = inlined_call_operand.vmem [shape: f32[8,128], index: 5, kind: output, shape index: {}]
  %s6 = sld [smem:[#allocation0]]
  $region42: #{dqn_forward.1} parent=0
    _
  %s8 = ssub.s32 1, %s6
  %s9 = scalar_select 0, %s8, %s6
  $region1: #{dqn_forward.1} parent=0
    #allocation2 [shape = 'u8[4096]{0}', space=vmem, size = 0x1000, scoped, tag = 'input window, operand 0, single buffered']
    #allocation3 [shape = 's32[1]{0}', space=sflag, size = 0x4, scoped, tag = 'scoped memory for dqn_forward.1']
    #allocation4 [shape = 'u8[8192]{0}', space=vmem, size = 0x2000, scoped, tag = 'input window, operand 1, single buffered']
    #allocation5 [shape = 's32[1]{0}', space=sflag, size = 0x4, scoped, tag = 'scoped memory for dqn_forward.1']
    #allocation6 [shape = 'u8[65536]{0}', space=vmem, size = 0x10000, scoped, tag = 'input window, operand 3, single buffered']
    %10 = vsyncpa [#allocation3], 0
    %11 = vsyncpa [#allocation5], 0
    // Predicated region
    $region2: #{dqn_forward.1} parent=1 // pred_check
      _
    $region3: #{dqn_forward.1} parent=1 // pred_check_branch
      %13 = sbr.rel (0) target = $region5
    $region4: #{dqn_forward.1} parent=1 // pred_region
      %15 = vsyncadd [#allocation3], 0
      %s17 = sshll.u32 %s0, 4
      %s18 = int_to_ptr.hbm [resolvable:$true] %s17
      %s19 = sshll.u32 [#allocation2], 4
      %s20 = int_to_ptr.vmem [resolvable:$true] %s19
      %22 = dma.hbm_to_vmem [thread:$0]  %s18, 128, %s20, [#allocation3]
    $region5: #{dqn_forward.1} parent=1 // pred_fallthru
      _
    // Predicated region
    $region6: #{dqn_forward.1} parent=1 // pred_check
      _
    $region7: #{dqn_forward.1} parent=1 // pred_check_branch
      %24 = sbr.rel (0) target = $region9
    $region8: #{dqn_forward.1} parent=1 // pred_region
      %26 = vsyncadd [#allocation5], 0
      %s27 = sshll.u32 %s1, 4
      %s28 = int_to_ptr.hbm [resolvable:$true] %s27
      %s29 = sshll.u32 [#allocation4], 4
      %s30 = int_to_ptr.vmem [resolvable:$true] %s29
      %35 = dma.hbm_to_vmem [thread:$0]  %s28, 256, %s30, [#allocation5], 128, 128, 8
    $region9: #{dqn_forward.1} parent=1 // pred_fallthru
      _
    // Predicated region
    $region10: #{dqn_forward.1} parent=1 // pred_check
      _
    $region11: #{dqn_forward.1} parent=1 // pred_check_branch
      %37 = sbr.rel (0) target = $region13
    $region12: #{dqn_forward.1} parent=1 // pred_region
      _
    $region13: #{dqn_forward.1} parent=1 // pred_fallthru
      _
    // Predicated region
    $region14: #{dqn_forward.1} parent=1 // pred_check
      _
    $region15: #{dqn_forward.1} parent=1 // pred_check_branch
      %39 = sbr.rel (0) target = $region17
    $region16: #{dqn_forward.1} parent=1 // pred_region
      %41 = vsyncadd [#allocation5], 0
      %s42 = sshll.u32 %s3, 4
      %s43 = int_to_ptr.hbm [resolvable:$true] %s42
      %s44 = sshll.u32 [#allocation6], 4
      %s45 = int_to_ptr.vmem [resolvable:$true] %s44
      %50 = dma.hbm_to_vmem [thread:$0]  %s43, 2048, %s45, [#allocation5], 128, 128, 8
    $region17: #{dqn_forward.1} parent=1 // pred_fallthru
      _
    // Predicated region
    $region18: #{dqn_forward.1} parent=1 // pred_check
      _
    $region19: #{dqn_forward.1} parent=1 // pred_check_branch
      %52 = sbr.rel (0) target = $region21
    $region20: #{dqn_forward.1} parent=1 // pred_region
      _
    $region21: #{dqn_forward.1} parent=1 // pred_fallthru
      _
    // Predicated region
    $region22: #{dqn_forward.1} parent=1 // pred_check
      _
    $region23: #{dqn_forward.1} parent=1 // pred_check_branch
      %54 = sbr.rel (0) target = $region25
    $region24: #{dqn_forward.1} parent=1 // pred_region
      %56 = dma.done [#allocation3], 128
    $region25: #{dqn_forward.1} parent=1 // pred_fallthru
      _
    // Predicated region
    $region26: #{dqn_forward.1} parent=1 // pred_check
      _
    $region27: #{dqn_forward.1} parent=1 // pred_check_branch
      %58 = sbr.rel (0) target = $region29
    $region28: #{dqn_forward.1} parent=1 // pred_region
      %60 = dma.done [#allocation5], 256
    $region29: #{dqn_forward.1} parent=1 // pred_fallthru
      _
    // Predicated region
    $region30: #{dqn_forward.1} parent=1 // pred_check
      _
    $region31: #{dqn_forward.1} parent=1 // pred_check_branch
      %62 = sbr.rel (0) target = $region33
    $region32: #{dqn_forward.1} parent=1 // pred_region
      %64 = dma.done [#allocation5], 2048
    $region33: #{dqn_forward.1} parent=1 // pred_fallthru
      _
    %v65 = vld [vmem:[#allocation2] sm:$0xff]
    %v66 = vld [vmem:[#allocation4] sm:$0xff]
    %v67 = vld [vmem:[#allocation4 + $0x8] sm:$0xff]
    %v68 = vld [vmem:[%s2] sm:$0x1]
    %v70 = vperm.slane %v68, 0
    %vm72 = vcmask 130048
    %v74 = vsel %vm72, %v65, 0
    %76 = vmatpush.msra.mxu0 0.0
    %77 = vmatpush.msra.mxu0 0.0
    %78 = vmatpush.msra.mxu0 0.0
    %79 = vmatpush.msra.mxu0 0.0
    %80 = vmatpush.msra.mxu0 0.0
    %81 = vmatpush.msra.mxu0 0.0
    %82 = vmatpush.msra.mxu0 0.0
    %83 = vmatpush.msra.mxu0 0.0
    %84 = vmatpush.msra.mxu0 0.0
    %85 = vmatpush.msra.mxu0 0.0
    %86 = vmatpush.msra.mxu0 0.0
    %87 = vmatpush.msra.mxu0 0.0
    %88 = vmatpush.msra.mxu0 0.0
    %89 = vmatpush.msra.mxu0 0.0
    %90 = vmatpush.msra.mxu0 %v67
    %91 = vmatpush.msra.mxu0 %v66
    %92 = vmatmul.f32.gmra.mxu0 %v74
    %v93 = vpop.f32.mrf.mxu0
    %v94 = vadd.f32 %v70, %v93
    %95 = vdwg.mxu0
    %v96 = vmax.f32 %v94, 0.0
    %v97 = vld [vmem:[#allocation6] sm:$0xff]
    %v98 = vld [vmem:[#allocation6 + $0x8] sm:$0xff]
    %v99 = vld [vmem:[#allocation6 + $0x10] sm:$0xff]
    %v100 = vld [vmem:[#allocation6 + $0x18] sm:$0xff]
    %v101 = vld [vmem:[#allocation6 + $0x20] sm:$0xff]
    %v102 = vld [vmem:[#allocation6 + $0x28] sm:$0xff]
    %v103 = vld [vmem:[#allocation6 + $0x30] sm:$0xff]
    %v104 = vld [vmem:[#allocation6 + $0x38] sm:$0xff]
    %v105 = vld [vmem:[#allocation6 + $0x40] sm:$0xff]
    %v106 = vld [vmem:[#allocation6 + $0x48] sm:$0xff]
    %v107 = vld [vmem:[#allocation6 + $0x50] sm:$0xff]
    %v108 = vld [vmem:[#allocation6 + $0x58] sm:$0xff]
    %v109 = vld [vmem:[#allocation6 + $0x60] sm:$0xff]
    %v110 = vld [vmem:[#allocation6 + $0x68] sm:$0xff]
    %v111 = vld [vmem:[#allocation6 + $0x70] sm:$0xff]
    %v112 = vld [vmem:[#allocation6 + $0x78] sm:$0xff]
    %v113 = vld [vmem:[%s4] sm:$0x1]
    %v115 = vperm.slane %v113, 0
    %117 = vmatpush.msra.mxu0 %v112
    %118 = vmatpush.msra.mxu0 %v111
    %119 = vmatpush.msra.mxu0 %v110
    %120 = vmatpush.msra.mxu0 %v109
    %121 = vmatpush.msra.mxu0 %v108
    %122 = vmatpush.msra.mxu0 %v107
    %123 = vmatpush.msra.mxu0 %v106
    %124 = vmatpush.msra.mxu0 %v105
    %125 = vmatpush.msra.mxu0 %v104
    %126 = vmatpush.msra.mxu0 %v103
    %127 = vmatpush.msra.mxu0 %v102
    %128 = vmatpush.msra.mxu0 %v101
    %129 = vmatpush.msra.mxu0 %v100
    %130 = vmatpush.msra.mxu0 %v99
    %131 = vmatpush.msra.mxu0 %v98
    %132 = vmatpush.msra.mxu0 %v97
    %133 = vmatmul.f32.gmra.mxu0 %v96
    %v134 = vpop.f32.mrf.mxu0
    %v135 = vadd.f32 %v115, %v134
    %136 = vdwg.mxu0
    %137 = vst [vmem:[%s5] sm:$0xff] %v135
    // Predicated region
    $region34: #{dqn_forward.1} parent=1 // pred_check
      _
    $region35: #{dqn_forward.1} parent=1 // pred_check_branch
      %139 = sbr.rel (0) target = $region37
    $region36: #{dqn_forward.1} parent=1 // pred_region
      _
    $region37: #{dqn_forward.1} parent=1 // pred_fallthru
      _
    // Predicated region
    $region38: #{dqn_forward.1} parent=1 // pred_check
      _
    $region39: #{dqn_forward.1} parent=1 // pred_check_branch
      %141 = sbr.rel (0) target = $region41
    $region40: #{dqn_forward.1} parent=1 // pred_region
      _
    $region41: #{dqn_forward.1} parent=1 // pred_fallthru
      _
    %142 = vsyncpa [#allocation3], 1
    %143 = vsyncpa [#allocation5], 1

</llo_original>
